<compile_context>
chip_gen: v7x
topology: tpu7x:2x2x1
jax: 0.10.0
libtpu: 0.0.40
codegen_flags: <defaults>
</compile_context>

<pallas_src>
import jax
import jax.numpy as jnp
from jax.experimental import pallas as pl
from jax.experimental.pallas import tpu as pltpu


def _round_up(v: int, m: int) -> int:
    return ((v + m - 1) // m) * m


def _pick_tile_m(n_rows: int) -> int:
    # Prefer big tiles (amortize ~0.35us/step), but keep >=8 grid steps when
    # possible so BlockSpec double-buffering actually pipelines and v7x's two
    # TensorCores both get several tiles.
    tm = 512
    while tm > 128 and pl.cdiv(n_rows, tm) < 8:
        tm //= 2
    return tm


def pack_params(W, b, *, use_bf16: bool = True):
    """Pack per-dim Linear params once (call this outside the per-step hot path).

    W: (num_dims, F_in, F_out) f32, b: (num_dims, F_out) f32
    Returns:
      W_packed: (F_in, num_dims * f_pad) in bf16 (or f32), lane-dense columns,
                each dim's output block padded to a multiple of 128 lanes.
      b_packed: (num_dims, f_pad) f32 (bias added post-matmul in f32).
      F_out:    real output width.
    """
    num_dims, F_in, F_out = W.shape
    f_pad = max(128, _round_up(F_out, 128))
    compute_dtype = jnp.bfloat16 if use_bf16 else jnp.float32
    W_pad = jnp.zeros((num_dims, F_in, f_pad), jnp.float32).at[:, :, :F_out].set(W)
    W_packed = jnp.transpose(W_pad, (1, 0, 2)).reshape(F_in, num_dims * f_pad)
    W_packed = W_packed.astype(compute_dtype)
    b_packed = jnp.zeros((num_dims, f_pad), jnp.float32).at[:, :F_out].set(b)
    return W_packed, b_packed, F_out


def _make_kernel(num_dims: int, f_pad: int, f_out: int, compute_dtype):
    def kernel(dims_ref, x_ref, w_ref, b_ref, o_ref):
        # In-kernel cast: x is read from HBM once as f32; casting here avoids a
        # separate wrapper-side cast pass over x.
        x = x_ref[...].astype(compute_dtype)               # (TM, F_in)
        dims = dims_ref[...]                               # (TM, 1) int32

        # One lane-dense MXU matmul against ALL per-dim weights, f32 accumulation.
        y_all = jnp.dot(x, w_ref[...], preferred_element_type=jnp.float32)
        b_all = b_ref[...]                                 # (num_dims, f_pad) f32

        # Per-row dimension select: one-hot multiply-accumulate over whole
        # 128-lane slices. Bias is gated by the same select, so rows whose dim
        # is outside [0, num_dims) stay exactly zero (torch.zeros semantics).
        acc = jnp.zeros((x_ref.shape[0], f_pad), jnp.float32)
        for i in range(num_dims):
            sel = (dims == i).astype(jnp.float32)          # (TM, 1)
            acc = acc + sel * (y_all[:, i * f_pad:(i + 1) * f_pad] + b_all[i, :])

        # Store only the real F_out columns (masked store, 4x less writeback
        # than a 128-lane padded slab), no post-kernel slice needed.
        o_ref[...] = acc[:, :f_out]

    return kernel


def multi_dimensional_forward(x, cell_dimensions, W_packed, b_packed, F_out,
                              *, tile_m: int | None = None):
    """x: (N, F_in) f32, cell_dimensions: (N,) int,
       W_packed/b_packed from pack_params() -> out: (N, F_out) f32."""
    N, F_in = x.shape
    num_dims, f_pad = b_packed.shape
    P = num_dims * f_pad
    assert W_packed.shape == (F_in, P)

    if tile_m is None:
        tile_m = _pick_tile_m(N)
    tile_m = max(16, (tile_m // 16) * 16)   # (16,128) bf16 tile alignment

    # Tiny per-call prep (4*N bytes); real inputs go to the kernel untouched.
    dims2d = cell_dimensions.astype(jnp.int32).reshape(N, 1)

    grid = (pl.cdiv(N, tile_m),)   # partial last block: OOB rows never written back
    out = pl.pallas_call(
        _make_kernel(num_dims, f_pad, F_out, W_packed.dtype),
        out_shape=jax.ShapeDtypeStruct((N, F_out), jnp.float32),
        grid_spec=pltpu.PrefetchScalarGridSpec(
            num_scalar_prefetch=0,
            grid=grid,
            in_specs=[
                pl.BlockSpec((tile_m, 1), lambda i: (i, 0)),       # dims
                pl.BlockSpec((tile_m, F_in), lambda i: (i, 0)),    # x (f32, cast in-kernel)
                # Packed weights/bias: constant index_map -> DMA'd once, kept
                # resident across all row tiles (no refetch). See header note
                # about Buffered(1)/K-tiling once the slab grows toward v7x's
                # 64 MiB VMEM.
                pl.BlockSpec((F_in, P), lambda i: (0, 0)),          # W packed
                pl.BlockSpec((num_dims, f_pad), lambda i: (0, 0)),  # b packed
            ],
            out_specs=pl.BlockSpec((tile_m, F_out), lambda i: (i, 0)),
        ),
        compiler_params=pltpu.CompilerParams(
            dimension_semantics=("parallel",),   # row tiles shard across TCs
        ),
    )(dims2d, x, W_packed, b_packed)
    return out


def reference_forward(x, cell_dimensions, W, b):
    """Pure-JAX reference mirroring the PyTorch loop-and-scatter forward."""
    N = x.shape[0]
    F_out = W.shape[2]
    out = jnp.zeros((N, F_out), jnp.float32)
    for i in range(W.shape[0]):
        mask = (cell_dimensions == i)[:, None]
        yi = x @ W[i] + b[i]
        out = jnp.where(mask, yi, out)
    return out


if __name__ == "__main__":
    max_dim = 2                 # -> 3 per-dimension Linear nets
    num_dims = max_dim + 1
    N, F_in, F_out = 1000, 32, 32   # N deliberately NOT a tile multiple

    key = jax.random.PRNGKey(0)
    kx, kd, kw, kb = jax.random.split(key, 4)

    x = jax.random.normal(kx, (N, F_in), dtype=jnp.float32)
    cell_dimensions = jax.random.randint(kd, (N,), 0, num_dims, dtype=jnp.int32)

    # Deterministic per-dimension Linear params (net_fn() called max_dim+1 times).
    W = jax.random.normal(kw, (num_dims, F_in, F_out), dtype=jnp.float32) * 0.1
    b = jax.random.normal(kb, (num_dims, F_out), dtype=jnp.float32) * 0.1

    ref = reference_forward(x, cell_dimensions, W, b)

    # Full-f32 path: tight tolerance vs reference.
    Wp32, bp32, fo = pack_params(W, b, use_bf16=False)   # packed once, off hot path
    out_f32 = jax.block_until_ready(
        multi_dimensional_forward(x, cell_dimensions, Wp32, bp32, fo))
    assert out_f32.shape == (N, F_out)
    assert jnp.allclose(out_f32, ref, atol=1e-4, rtol=1e-4), "f32 path mismatch"

    # bf16-weight/activation MXU path (perf path on v6e/v7x), f32 accumulation.
    Wpbf, bpbf, fo = pack_params(W, b, use_bf16=True)
    out_bf16 = jax.block_until_ready(
        multi_dimensional_forward(x, cell_dimensions, Wpbf, bpbf, fo))
    assert out_bf16.shape == (N, F_out)
    assert jnp.allclose(out_bf16, ref, atol=5e-2, rtol=5e-2), "bf16 path mismatch"

    print("KERNEL_OK")
</pallas_src>

<mosaic_0001>
module attributes {stable_mosaic.version = 11 : i64} {
  func.func @kernel(%arg0: i32, %arg1: memref<128x1xi32, #tpu.memory_space<vmem>>, %arg2: memref<128x32xf32, #tpu.memory_space<vmem>>, %arg3: memref<32x384xf32, #tpu.memory_space<vmem>>, %arg4: memref<3x128xf32, #tpu.memory_space<vmem>>, %arg5: memref<128x32xf32, #tpu.memory_space<vmem>>) attributes {dimension_semantics = [#tpu.dimension_semantics<parallel>], iteration_bounds = array<i64: 8>, scalar_prefetch = 0 : i64, scratch_operands = 0 : i64, tpu.core_type = #tpu.core_type<tc>, window_params = [{transform_indices = @transform_0, window_bounds = array<i64: 128, 1>}, {transform_indices = @transform_1, window_bounds = array<i64: 128, 32>}, {pipeline_mode = #tpu.pipeline_mode<synchronous>, transform_indices = @transform_2, window_bounds = array<i64: 32, 384>}, {pipeline_mode = #tpu.pipeline_mode<synchronous>, transform_indices = @transform_3, window_bounds = array<i64: 3, 128>}, {transform_indices = @transform_4, window_bounds = array<i64: 128, 32>}]} {
    %c0 = arith.constant 0 : index
    %c0_0 = arith.constant 0 : index
    %0 = vector.load %arg2[%c0, %c0_0] : memref<128x32xf32, #tpu.memory_space<vmem>>, vector<128x32xf32>
    %c0_1 = arith.constant 0 : index
    %c0_2 = arith.constant 0 : index
    %1 = vector.load %arg1[%c0_1, %c0_2] : memref<128x1xi32, #tpu.memory_space<vmem>>, vector<128x1xi32>
    %c0_3 = arith.constant 0 : index
    %c0_4 = arith.constant 0 : index
    %2 = vector.load %arg3[%c0_3, %c0_4] : memref<32x384xf32, #tpu.memory_space<vmem>>, vector<32x384xf32>
    %cst = arith.constant dense<0.000000e+00> : vector<128x384xf32>
    %3 = tpu.matmul %0, %2, %cst {dimension_numbers = #tpu.dot_dimension_numbers<[1], [0], [0], [1], [0, 0, 1, 1], [], []>} : vector<128x32xf32>, vector<32x384xf32>, vector<128x384xf32> -> vector<128x384xf32>
    %c0_5 = arith.constant 0 : index
    %c0_6 = arith.constant 0 : index
    %4 = vector.load %arg4[%c0_5, %c0_6] : memref<3x128xf32, #tpu.memory_space<vmem>>, vector<3x128xf32>
    %cst_7 = arith.constant 0.000000e+00 : f32
    %5 = vector.broadcast %cst_7 : f32 to vector<128x128xf32>
    %c0_i32 = arith.constant 0 : i32
    %6 = vector.broadcast %c0_i32 : i32 to vector<128x1xi32>
    %7 = arith.cmpi eq, %1, %6 : vector<128x1xi32>
    %8 = arith.extui %7 : vector<128x1xi1> to vector<128x1xi32>
    %9 = arith.sitofp %8 : vector<128x1xi32> to vector<128x1xf32>
    %10 = vector.extract_strided_slice %3 {offsets = [0, 0], sizes = [128, 128], strides = [1, 1]} : vector<128x384xf32> to vector<128x128xf32>
    %11 = vector.extract_strided_slice %4 {offsets = [0, 0], sizes = [1, 128], strides = [1, 1]} : vector<3x128xf32> to vector<1x128xf32>
    %12 = vector.shape_cast %11 : vector<1x128xf32> to vector<128xf32>
    %13 = vector.shape_cast %12 : vector<128xf32> to vector<1x128xf32>
    %14 = vector.broadcast %13 : vector<1x128xf32> to vector<128x128xf32>
    %15 = arith.addf %10, %14 : vector<128x128xf32>
    %16 = vector.broadcast %9 : vector<128x1xf32> to vector<128x128xf32>
    %17 = arith.mulf %16, %15 : vector<128x128xf32>
    %18 = arith.addf %5, %17 : vector<128x128xf32>
    %c1_i32 = arith.constant 1 : i32
    %19 = vector.broadcast %c1_i32 : i32 to vector<128x1xi32>
    %20 = arith.cmpi eq, %1, %19 : vector<128x1xi32>
    %21 = arith.extui %20 : vector<128x1xi1> to vector<128x1xi32>
    %22 = arith.sitofp %21 : vector<128x1xi32> to vector<128x1xf32>
    %23 = vector.extract_strided_slice %3 {offsets = [0, 128], sizes = [128, 128], strides = [1, 1]} : vector<128x384xf32> to vector<128x128xf32>
    %24 = vector.extract_strided_slice %4 {offsets = [1, 0], sizes = [1, 128], strides = [1, 1]} : vector<3x128xf32> to vector<1x128xf32>
    %25 = vector.shape_cast %24 : vector<1x128xf32> to vector<128xf32>
    %26 = vector.shape_cast %25 : vector<128xf32> to vector<1x128xf32>
    %27 = vector.broadcast %26 : vector<1x128xf32> to vector<128x128xf32>
    %28 = arith.addf %23, %27 : vector<128x128xf32>
    %29 = vector.broadcast %22 : vector<128x1xf32> to vector<128x128xf32>
    %30 = arith.mulf %29, %28 : vector<128x128xf32>
    %31 = arith.addf %18, %30 : vector<128x128xf32>
    %c2_i32 = arith.constant 2 : i32
    %32 = vector.broadcast %c2_i32 : i32 to vector<128x1xi32>
    %33 = arith.cmpi eq, %1, %32 : vector<128x1xi32>
    %34 = arith.extui %33 : vector<128x1xi1> to vector<128x1xi32>
    %35 = arith.sitofp %34 : vector<128x1xi32> to vector<128x1xf32>
    %36 = vector.extract_strided_slice %3 {offsets = [0, 256], sizes = [128, 128], strides = [1, 1]} : vector<128x384xf32> to vector<128x128xf32>
    %37 = vector.extract_strided_slice %4 {offsets = [2, 0], sizes = [1, 128], strides = [1, 1]} : vector<3x128xf32> to vector<1x128xf32>
    %38 = vector.shape_cast %37 : vector<1x128xf32> to vector<128xf32>
    %39 = vector.shape_cast %38 : vector<128xf32> to vector<1x128xf32>
    %40 = vector.broadcast %39 : vector<1x128xf32> to vector<128x128xf32>
    %41 = arith.addf %36, %40 : vector<128x128xf32>
    %42 = vector.broadcast %35 : vector<128x1xf32> to vector<128x128xf32>
    %43 = arith.mulf %42, %41 : vector<128x128xf32>
    %44 = arith.addf %31, %43 : vector<128x128xf32>
    %45 = vector.extract_strided_slice %44 {offsets = [0, 0], sizes = [128, 32], strides = [1, 1]} : vector<128x128xf32> to vector<128x32xf32>
    %c0_8 = arith.constant 0 : index
    %c0_9 = arith.constant 0 : index
    %46 = vector.load %arg5[%c0_8, %c0_9] : memref<128x32xf32, #tpu.memory_space<vmem>>, vector<128x32xf32>
    tpu.vector_store %arg5[%c0_8, %c0_9], %45 {strides = array<i32>} : memref<128x32xf32, #tpu.memory_space<vmem>>, vector<128x32xf32>,
    return
  }
  func.func @transform_0(%arg0: i32) -> (i32, i32) {
    %c0_i32 = arith.constant 0 : i32
    %c0_i32_0 = arith.constant 0 : i32
    return %arg0, %c0_i32 : i32, i32
  }
  func.func @transform_1(%arg0: i32) -> (i32, i32) {
    %c0_i32 = arith.constant 0 : i32
    %c0_i32_0 = arith.constant 0 : i32
    return %arg0, %c0_i32 : i32, i32
  }
  func.func @transform_2(%arg0: i32) -> (i32, i32) {
    %c0_i32 = arith.constant 0 : i32
    %c0_i32_0 = arith.constant 0 : i32
    %c0_i32_1 = arith.constant 0 : i32
    return %c0_i32, %c0_i32_0 : i32, i32
  }
  func.func @transform_3(%arg0: i32) -> (i32, i32) {
    %c0_i32 = arith.constant 0 : i32
    %c0_i32_0 = arith.constant 0 : i32
    %c0_i32_1 = arith.constant 0 : i32
    return %c0_i32, %c0_i32_0 : i32, i32
  }
  func.func @transform_4(%arg0: i32) -> (i32, i32) {
    %c0_i32 = arith.constant 0 : i32
    %c0_i32_0 = arith.constant 0 : i32
    return %arg0, %c0_i32 : i32, i32
  }
}

</mosaic_0001>

<llo_original>
// kernel: tpu_custom_call.1
$region0: #{tpu_custom_call.1}
  #allocation0 [shape = 'u32[]', space=smem, size = 0x4, offset = 0x4, fixed_abs, tag = 'smem constant byte address 0x4 - core index']
  #allocation1 [shape = 'u32[144,128]{1,0:T(1,128)}', space=vmem, size = 0x12000, scoped, tag = 'internal scratch']
  %s0 = inlined_call_operand.vmem [shape: s32[1000,1], index: 0, kind: input, shape index: {}]
  %s1 = inlined_call_operand.vmem [shape: f32[1000,32], index: 1, kind: input, shape index: {}]
  %s2 = inlined_call_operand.vmem [shape: f32[32,384], index: 2, kind: input, shape index: {}]
  %s3 = inlined_call_operand.vmem [shape: f32[3,128], index: 3, kind: input, shape index: {}]
  %s4 = inlined_call_operand.vmem [shape: f32[1000,32], index: 4, kind: output, shape index: {}]
  %s5 = sld [smem:[#allocation0]]
  $region97: #{tpu_custom_call.1} parent=0
    _
  %s7 = ssub.s32 1, %s5
  %s8 = scalar_select 0, %s7, %s5
  $region1: #{tpu_custom_call.1} parent=0
    #allocation2 [shape = 'u8[131072]{0}', space=vmem, size = 0x20000, scoped, tag = 'output window, operand 0']
    loop: start=0, step=1, limit=10
    $region2: #{tpu_custom_call.1} parent=1 // loop_pre_header
      _
    $region3: #{tpu_custom_call.1} parent=1 // loop_header
      %s10 = sphi 0, %s14
      %p11 = scmp.ge.s32.totalorder %s10, 10
      %s20 = sphi 0, %s22
      %s23 = sphi 0, %s20
      %s24 = sphi 0, %s23
      %s40 = sphi 0, %s24
      %s46 = sphi 0, %s48
      %s49 = sphi 0, %s46
      %s50 = sphi 0, %s49
      %s66 = sphi 0, %s50
      %s70 = sphi 0, %s70
      %s72 = sphi 0, %s70
      %s73 = sphi 0, %s72
      %s87 = sphi 0, %s73
      %s91 = sphi 0, %s91
      %s93 = sphi 0, %s91
      %s94 = sphi 0, %s93
      %s108 = sphi 0, %s94
      %s114 = sphi 0, %s116
      %s117 = sphi 0, %s114
      %s118 = sphi 0, %s117
      %s134 = sphi 0, %s118
    $region4: #{tpu_custom_call.1} parent=1 // loop_header_branch
      %13 = sbr.rel (%p11) target = $region8
    $region5: #{tpu_custom_call.1} parent=1 // loop_body
      %s15 = ssub.s32 %s10, 1
      %s16 = ssub.s32 %s10, 2
      %s17 = sadd.s32 %s10, 1
      %s18 = ssub.s32 %s10, %s17
      %p19 = scmp.eq.s32.totalorder %s18, 0
      %s21 = sadd.s32 %s20, 1
      %s22 = scalar_select %p19, %s20, %s21
      %p25 = pneg %p19
      %p26 = scmp.eq.s32.totalorder %s10, 7
      %p27 = por %p25, %p26
      %p28 = scmp.ne.s32.totalorder %s20, %s23
      %p29 = scmp.eq.s32.totalorder %s10, 0
      %p30 = por %p28, %p29
      %p31 = scmp.ne.s32.totalorder %s20, %s23
      %p32 = scmp.eq.s32.totalorder %s15, 7
      %p33 = por %p31, %p32
      %p34 = scmp.ne.s32.totalorder %s23, %s24
      %p35 = scmp.eq.s32.totalorder %s15, 0
      %p36 = por %p34, %p35
      %p37 = scmp.ne.s32.totalorder %s23, %s24
      %p38 = scmp.eq.s32.totalorder %s16, 7
      %p39 = por %p37, %p38
      %p41 = scmp.ne.s32.totalorder %s24, %s40
      %p42 = scmp.eq.s32.totalorder %s16, 0
      %p43 = por %p41, %p42
      %s44 = ssub.s32 %s10, %s17
      %p45 = scmp.eq.s32.totalorder %s44, 0
      %s47 = sadd.s32 %s46, 1
      %s48 = scalar_select %p45, %s46, %s47
      %p51 = pneg %p45
      %p52 = scmp.eq.s32.totalorder %s10, 7
      %p53 = por %p51, %p52
      %p54 = scmp.ne.s32.totalorder %s46, %s49
      %p55 = scmp.eq.s32.totalorder %s10, 0
      %p56 = por %p54, %p55
      %p57 = scmp.ne.s32.totalorder %s46, %s49
      %p58 = scmp.eq.s32.totalorder %s15, 7
      %p59 = por %p57, %p58
      %p60 = scmp.ne.s32.totalorder %s49, %s50
      %p61 = scmp.eq.s32.totalorder %s15, 0
      %p62 = por %p60, %p61
      %p63 = scmp.ne.s32.totalorder %s49, %s50
      %p64 = scmp.eq.s32.totalorder %s16, 7
      %p65 = por %p63, %p64
      %p67 = scmp.ne.s32.totalorder %s50, %s66
      %p68 = scmp.eq.s32.totalorder %s16, 0
      %p69 = por %p67, %p68
      %s71 = sadd.s32 %s70, 1
      %p74 = scmp.eq.s32.totalorder %s10, 7
      %p75 = scmp.ne.s32.totalorder %s70, %s72
      %p76 = scmp.eq.s32.totalorder %s10, 0
      %p77 = por %p75, %p76
      %p78 = scmp.ne.s32.totalorder %s70, %s72
      %p79 = scmp.eq.s32.totalorder %s15, 7
      %p80 = por %p78, %p79
      %p81 = scmp.ne.s32.totalorder %s72, %s73
      %p82 = scmp.eq.s32.totalorder %s15, 0
      %p83 = por %p81, %p82
      %p84 = scmp.ne.s32.totalorder %s72, %s73
      %p85 = scmp.eq.s32.totalorder %s16, 7
      %p86 = por %p84, %p85
      %p88 = scmp.ne.s32.totalorder %s73, %s87
      %p89 = scmp.eq.s32.totalorder %s16, 0
      %p90 = por %p88, %p89
      %s92 = sadd.s32 %s91, 1
      %p95 = scmp.eq.s32.totalorder %s10, 7
      %p96 = scmp.ne.s32.totalorder %s91, %s93
      %p97 = scmp.eq.s32.totalorder %s10, 0
      %p98 = por %p96, %p97
      %p99 = scmp.ne.s32.totalorder %s91, %s93
      %p100 = scmp.eq.s32.totalorder %s15, 7
      %p101 = por %p99, %p100
      %p102 = scmp.ne.s32.totalorder %s93, %s94
      %p103 = scmp.eq.s32.totalorder %s15, 0
      %p104 = por %p102, %p103
      %p105 = scmp.ne.s32.totalorder %s93, %s94
      %p106 = scmp.eq.s32.totalorder %s16, 7
      %p107 = por %p105, %p106
      %p109 = scmp.ne.s32.totalorder %s94, %s108
      %p110 = scmp.eq.s32.totalorder %s16, 0
      %p111 = por %p109, %p110
      %s112 = ssub.s32 %s10, %s17
      %p113 = scmp.eq.s32.totalorder %s112, 0
      %s115 = sadd.s32 %s114, 1
      %s116 = scalar_select %p113, %s114, %s115
      %p119 = pneg %p113
      %p120 = scmp.eq.s32.totalorder %s10, 7
      %p121 = por %p119, %p120
      %p122 = scmp.ne.s32.totalorder %s114, %s117
      %p123 = scmp.eq.s32.totalorder %s10, 0
      %p124 = por %p122, %p123
      %p125 = scmp.ne.s32.totalorder %s114, %s117
      %p126 = scmp.eq.s32.totalorder %s15, 7
      %p127 = por %p125, %p126
      %p128 = scmp.ne.s32.totalorder %s117, %s118
      %p129 = scmp.eq.s32.totalorder %s15, 0
      %p130 = por %p128, %p129
      %p131 = scmp.ne.s32.totalorder %s117, %s118
      %p132 = scmp.eq.s32.totalorder %s16, 7
      %p133 = por %p131, %p132
      %p135 = scmp.ne.s32.totalorder %s118, %s134
      %p136 = scmp.eq.s32.totalorder %s16, 0
      %p137 = por %p135, %p136
      %p138 = scmp.le.s32.totalorder 1, %s10
      %p139 = scmp.lt.s32.totalorder %s10, 9
      %p140 = pnand %p138, %p139
      %p141 = pneg %p140
      // Predicated region
      $region9: #{tpu_custom_call.1} parent=5 // pred_check
        _
      $region10: #{tpu_custom_call.1} parent=5 // pred_check_branch
        %143 = sbr.rel (%p140) target = $region12
      $region11: #{tpu_custom_call.1} parent=5 // pred_region
        %s144 = ssub.s32 %s10, 1
        // Predicated region
        $region13: #{tpu_custom_call.1} parent=11 // pred_check
          %p145 = pneg %p83
        $region14: #{tpu_custom_call.1} parent=11 // pred_check_branch
          %147 = sbr.rel (%p145) target = $region16
        $region15: #{tpu_custom_call.1} parent=11 // pred_region
          _
        $region16: #{tpu_custom_call.1} parent=11 // pred_fallthru
          _
        // Predicated region
        $region17: #{tpu_custom_call.1} parent=11 // pred_check
          %p148 = pneg %p104
        $region18: #{tpu_custom_call.1} parent=11 // pred_check_branch
          %150 = sbr.rel (%p148) target = $region20
        $region19: #{tpu_custom_call.1} parent=11 // pred_region
          _
        $region20: #{tpu_custom_call.1} parent=11 // pred_fallthru
          _
      $region12: #{tpu_custom_call.1} parent=5 // pred_fallthru
        _
      %p151 = scmp.lt.s32.totalorder %s10, 8
      // Predicated region
      $region21: #{tpu_custom_call.1} parent=5 // pred_check
        %p152 = pneg %p151
      $region22: #{tpu_custom_call.1} parent=5 // pred_check_branch
        %154 = sbr.rel (%p152) target = $region24
      $region23: #{tpu_custom_call.1} parent=5 // pred_region
        // Predicated region
        $region25: #{tpu_custom_call.1} parent=23 // pred_check
          %p155 = pneg %p30
        $region26: #{tpu_custom_call.1} parent=23 // pred_check_branch
          %157 = sbr.rel (%p155) target = $region28
        $region27: #{tpu_custom_call.1} parent=23 // pred_region
          %s158 = smul.u32 16, %s10
          %s159 = ssub.s32 125, %s158
          %p160 = scmp.lt.s32.totalorder %s159, 16
          %s161 = scalar_select %p160, %s159, 16
          %s162 = smul.u32 128, %s161
          %p163 = scmp.lt.s32.totalorder %s158, 124
          %s164 = scalar_select %p163, %s158, 124
          %s165 = smul.addr %s164, 8
          %s166 = scalar_lea.vmem %s0, %s165
          %s167 = smul.u32 16, %s10
          %s168 = ssub.s32 125, %s167
          %p169 = scmp.lt.s32.totalorder %s168, 16
          %s170 = scalar_select %p169, %s168, 16
          %s171 = smul.u32 128, %s170
        $region28: #{tpu_custom_call.1} parent=23 // pred_fallthru
          _
        // Predicated region
        $region29: #{tpu_custom_call.1} parent=23 // pred_check
          %p172 = pneg %p56
        $region30: #{tpu_custom_call.1} parent=23 // pred_check_branch
          %174 = sbr.rel (%p172) target = $region32
        $region31: #{tpu_custom_call.1} parent=23 // pred_region
          %s175 = smul.u32 16, %s10
          %s176 = ssub.s32 125, %s175
          %p177 = scmp.lt.s32.totalorder %s176, 16
          %s178 = scalar_select %p177, %s176, 16
          %s179 = smul.u32 128, %s178
          %p180 = scmp.lt.s32.totalorder %s175, 124
          %s181 = scalar_select %p180, %s175, 124
          %s182 = smul.addr %s181, 8
          %s183 = scalar_lea.vmem %s1, %s182
          %s184 = smul.u32 16, %s10
          %s185 = ssub.s32 125, %s184
          %p186 = scmp.lt.s32.totalorder %s185, 16
          %s187 = scalar_select %p186, %s185, 16
          %s188 = smul.u32 128, %s187
        $region32: #{tpu_custom_call.1} parent=23 // pred_fallthru
          _
      $region24: #{tpu_custom_call.1} parent=5 // pred_fallthru
        _
      %p189 = scmp.le.s32.totalorder 1, %s10
      %p190 = scmp.lt.s32.totalorder %s10, 9
      %p191 = pnand %p189, %p190
      %p192 = pneg %p191
      // Predicated region
      $region33: #{tpu_custom_call.1} parent=5 // pred_check
        _
      $region34: #{tpu_custom_call.1} parent=5 // pred_check_branch
        %194 = sbr.rel (%p191) target = $region36
      $region35: #{tpu_custom_call.1} parent=5 // pred_region
        %s195 = ssub.s32 %s10, 1
        %s196 = smul.u32 16, %s15
        %s197 = ssub.s32 125, %s196
        %p198 = scmp.lt.s32.totalorder %s197, 16
        %s199 = scalar_select %p198, %s197, 16
        %s200 = smul.u32 128, %s199
        %p201 = scmp.lt.s32.totalorder %s196, 124
        %s202 = scalar_select %p201, %s196, 124
        %s203 = smul.addr %s202, 8
        %s204 = scalar_lea.vmem %s0, %s203
        %p205 = pneg %p36
        %p206 = pneg %p33
        %s207 = smul.u32 16, %s15
        %s208 = ssub.s32 125, %s207
        %p209 = scmp.lt.s32.totalorder %s208, 16
        %s210 = scalar_select %p209, %s208, 16
        %s211 = smul.u32 128, %s210
        %p212 = scmp.lt.s32.totalorder %s207, 124
        %s213 = scalar_select %p212, %s207, 124
        %s214 = smul.addr %s213, 8
        %s215 = scalar_lea.vmem %s1, %s214
        %p216 = pneg %p62
        %p217 = pneg %p59
        %p218 = pneg %p83
        %p219 = pneg %p80
        %p220 = pneg %p104
        %p221 = pneg %p101
        %p222 = pneg %p130
        %p223 = pneg %p127
        %s224 = sand.u32 %s117, 1
        %s225 = sand.u32 %s117, 1
        %s226 = smul.addr %s225, 128
        %s227 = scalar_lea.vmem [#allocation2], %s226
        %s228 = smul.u32 16, %s15
        %s229 = ssub.s32 125, %s228
        %p230 = scmp.lt.s32.totalorder %s229, 16
        %s231 = scalar_select %p230, %s229, 16
        %s232 = smul.u32 128, %s231
        %p233 = scmp.lt.s32.totalorder %s228, 124
        %s234 = scalar_select %p233, %s228, 124
        %s235 = smul.addr %s234, 8
        %s236 = scalar_lea.vmem %s0, %s235
        %s237 = smul.u32 16, %s15
        %s238 = ssub.s32 125, %s237
        %p239 = scmp.lt.s32.totalorder %s238, 16
        %s240 = scalar_select %p239, %s238, 16
        %s241 = smul.u32 128, %s240
        %s242 = smul.u32 16, %s15
        %s243 = ssub.s32 125, %s242
        %p244 = scmp.lt.s32.totalorder %s243, 16
        %s245 = scalar_select %p244, %s243, 16
        %s246 = smul.u32 128, %s245
        %p247 = scmp.lt.s32.totalorder %s242, 124
        %s248 = scalar_select %p247, %s242, 124
        %s249 = smul.addr %s248, 8
        %s250 = scalar_lea.vmem %s1, %s249
        %s251 = smul.u32 16, %s15
        %s252 = ssub.s32 125, %s251
        %p253 = scmp.lt.s32.totalorder %s252, 16
        %s254 = scalar_select %p253, %s252, 16
        %s255 = smul.u32 128, %s254
        %s256 = smul.u32 16, %s15
        %s257 = ssub.s32 125, %s256
        %p258 = scmp.lt.s32.totalorder %s257, 16
        %s259 = scalar_select %p258, %s257, 16
        %s260 = smul.u32 128, %s259
        %v261 = vld [vmem:[%s250] sm:$0xff]
        %v262 = vld [vmem:[%s250 + $0x8] sm:$0xff]
        %v263 = vld [vmem:[%s250 + $0x10] sm:$0xff]
        %v264 = vld [vmem:[%s250 + $0x18] sm:$0xff]
        %v265 = vld [vmem:[%s250 + $0x20] sm:$0xff]
        %v266 = vld [vmem:[%s250 + $0x28] sm:$0xff]
        %v267 = vld [vmem:[%s250 + $0x30] sm:$0xff]
        %v268 = vld [vmem:[%s250 + $0x38] sm:$0xff]
        %v269 = vld [vmem:[%s250 + $0x40] sm:$0xff]
        %v270 = vld [vmem:[%s250 + $0x48] sm:$0xff]
        %v271 = vld [vmem:[%s250 + $0x50] sm:$0xff]
        %v272 = vld [vmem:[%s250 + $0x58] sm:$0xff]
        %v273 = vld [vmem:[%s250 + $0x60] sm:$0xff]
        %v274 = vld [vmem:[%s250 + $0x68] sm:$0xff]
        %v275 = vld [vmem:[%s250 + $0x70] sm:$0xff]
        %v276 = vld [vmem:[%s250 + $0x78] sm:$0xff]
        %v277 = vld [vmem:[%s236] sm:$0xff]
        %v278 = vld [vmem:[%s236 + $0x8] sm:$0xff]
        %v279 = vld [vmem:[%s236 + $0x10] sm:$0xff]
        %v280 = vld [vmem:[%s236 + $0x18] sm:$0xff]
        %v281 = vld [vmem:[%s236 + $0x20] sm:$0xff]
        %v282 = vld [vmem:[%s236 + $0x28] sm:$0xff]
        %v283 = vld [vmem:[%s236 + $0x30] sm:$0xff]
        %v284 = vld [vmem:[%s236 + $0x38] sm:$0xff]
        %v285 = vld [vmem:[%s236 + $0x40] sm:$0xff]
        %v286 = vld [vmem:[%s236 + $0x48] sm:$0xff]
        %v287 = vld [vmem:[%s236 + $0x50] sm:$0xff]
        %v288 = vld [vmem:[%s236 + $0x58] sm:$0xff]
        %v289 = vld [vmem:[%s236 + $0x60] sm:$0xff]
        %v290 = vld [vmem:[%s236 + $0x68] sm:$0xff]
        %v291 = vld [vmem:[%s236 + $0x70] sm:$0xff]
        %v292 = vld [vmem:[%s236 + $0x78] sm:$0xff]
        %v293 = vld [vmem:[%s2] sm:$0xff]
        %v294 = vld [vmem:[%s2 + $0x8] sm:$0xff]
        %v295 = vld [vmem:[%s2 + $0x10] sm:$0xff]
        %v296 = vld [vmem:[%s2 + $0x18] sm:$0xff]
        %v297 = vld [vmem:[%s2 + $0x20] sm:$0xff]
        %v298 = vld [vmem:[%s2 + $0x28] sm:$0xff]
        %v299 = vld [vmem:[%s2 + $0x30] sm:$0xff]
        %v300 = vld [vmem:[%s2 + $0x38] sm:$0xff]
        %v301 = vld [vmem:[%s2 + $0x40] sm:$0xff]
        %v302 = vld [vmem:[%s2 + $0x48] sm:$0xff]
        %v303 = vld [vmem:[%s2 + $0x50] sm:$0xff]
        %v304 = vld [vmem:[%s2 + $0x58] sm:$0xff]
        %vm305 = vcmask 261120
        %v307 = vsel %vm305, %v261, 0
        %v310 = vsel %vm305, %v262, 0
        %v313 = vsel %vm305, %v263, 0
        %v316 = vsel %vm305, %v264, 0
        %v319 = vsel %vm305, %v265, 0
        %v322 = vsel %vm305, %v266, 0
        %v325 = vsel %vm305, %v267, 0
        %v328 = vsel %vm305, %v268, 0
        %v331 = vsel %vm305, %v269, 0
        %v334 = vsel %vm305, %v270, 0
        %v337 = vsel %vm305, %v271, 0
        %v340 = vsel %vm305, %v272, 0
        %v343 = vsel %vm305, %v273, 0
        %v346 = vsel %vm305, %v274, 0
        %v349 = vsel %vm305, %v275, 0
        %v352 = vsel %vm305, %v276, 0
        %354 = vmatprep.subr.mxu0 %v294
        %355 = vmatpush1.msra.mxu0 %v293
        %356 = vmatprep.subr.mxu0 %v297
        %357 = vmatpush1.msra.mxu0 %v296
        %358 = vmatprep.subr.mxu0 %v300
        %359 = vmatpush1.msra.mxu0 %v299
        %360 = vmatprep.subr.mxu0 %v303
        %361 = vmatpush1.msra.mxu0 %v302
        %362 = vmatprep.subr.mxu0 0.0
        %363 = vmatpush1.msra.mxu0 0.0
        %364 = vmatprep.subr.mxu0 0.0
        %365 = vmatpush1.msra.mxu0 0.0
        %366 = vmatprep.subr.mxu0 0.0
        %367 = vmatpush1.msra.mxu0 0.0
        %368 = vmatprep.subr.mxu0 0.0
        %369 = vmatpush1.msra.mxu0 0.0
        %370 = vmatprep.subr.mxu0 0.0
        %371 = vmatpush1.msra.mxu0 0.0
        %372 = vmatprep.subr.mxu0 0.0
        %373 = vmatpush1.msra.mxu0 0.0
        %374 = vmatprep.subr.mxu0 0.0
        %375 = vmatpush1.msra.mxu0 0.0
        %376 = vmatprep.subr.mxu0 0.0
        %377 = vmatpush1.msra.mxu0 0.0
        %378 = vmatprep.subr.mxu0 0.0
        %379 = vmatpush1.msra.mxu0 0.0
        %380 = vmatprep.subr.mxu0 0.0
        %381 = vmatpush1.msra.mxu0 0.0
        %382 = vmatprep.subr.mxu0 0.0
        %383 = vmatpush1.msra.mxu0 0.0
        %384 = vmatprep.subr.mxu0 0.0
        %385 = vmatpush1.msra.mxu0 0.0
        %386 = vmatprep.subr.mxu0 0.0
        %387 = vmatpush1.msra.mxu0 0.0
        %388 = vmatprep.subr.mxu0 0.0
        %389 = vmatpush1.msra.mxu0 0.0
        %390 = vmatprep.subr.mxu0 0.0
        %391 = vmatpush1.msra.mxu0 0.0
        %392 = vmatprep.subr.mxu0 0.0
        %393 = vmatpush1.msra.mxu0 0.0
        %394 = vmatprep.subr.mxu0 0.0
        %395 = vmatpush1.msra.mxu0 0.0
        %396 = vmatprep.subr.mxu0 0.0
        %397 = vmatpush1.msra.mxu0 0.0
        %398 = vmatprep.subr.mxu0 0.0
        %399 = vmatpush1.msra.mxu0 0.0
        %400 = vmatprep.subr.mxu0 0.0
        %401 = vmatpush1.msra.mxu0 0.0
        %402 = vmatprep.subr.mxu0 0.0
        %403 = vmatpush1.msra.mxu0 0.0
        %404 = vmatprep.subr.mxu0 0.0
        %405 = vmatpush1.msra.mxu0 0.0
        %406 = vmatprep.subr.mxu0 0.0
        %407 = vmatpush1.msra.mxu0 0.0
        %408 = vmatprep.subr.mxu0 0.0
        %409 = vmatpush1.msra.mxu0 0.0
        %410 = vmatprep.subr.mxu0 0.0
        %411 = vmatpush1.msra.mxu0 0.0
        %412 = vmatprep.subr.mxu0 0.0
        %413 = vmatpush1.msra.mxu0 0.0
        %414 = vmatprep.subr.mxu0 0.0
        %415 = vmatpush1.msra.mxu0 0.0
        %416 = vmatprep.subr.mxu0 0.0
        %417 = vmatpush1.msra.mxu0 0.0
        %418 = vmatprep.mubr.f32.mxu0 0.0
        %419 = vmatmul.mubr.f32.gmra.mrb[0].mxu0 %v307
        %v420 = vpop.f32.mrb[0].mxu0
        %v421 = vadd.f32 0.0, %v420
        %v422 = vpop.f32.mrb[0].mxu0
        %v423 = vadd.f32 0.0, %v422
        %424 = vmatprep.mubr.f32.mxu0 0.0
        %425 = vmatmul.mubr.f32.gmra.mrb[0].mxu0 %v310
        %v426 = vpop.f32.mrb[0].mxu0
        %v427 = vadd.f32 0.0, %v426
        %v428 = vpop.f32.mrb[0].mxu0
        %v429 = vadd.f32 0.0, %v428
        %430 = vmatprep.mubr.f32.mxu0 0.0
        %431 = vmatmul.mubr.f32.gmra.mrb[0].mxu0 %v313
        %v432 = vpop.f32.mrb[0].mxu0
        %v433 = vadd.f32 0.0, %v432
        %v434 = vpop.f32.mrb[0].mxu0
        %v435 = vadd.f32 0.0, %v434
        %436 = vmatprep.mubr.f32.mxu0 0.0
        %437 = vmatmul.mubr.f32.gmra.mrb[0].mxu0 %v316
        %v438 = vpop.f32.mrb[0].mxu0
        %v439 = vadd.f32 0.0, %v438
        %v440 = vpop.f32.mrb[0].mxu0
        %v441 = vadd.f32 0.0, %v440
        %442 = vmatprep.mubr.f32.mxu0 0.0
        %443 = vmatmul.mubr.f32.gmra.mrb[0].mxu0 %v319
        %v444 = vpop.f32.mrb[0].mxu0
        %v445 = vadd.f32 0.0, %v444
        %v446 = vpop.f32.mrb[0].mxu0
        %v447 = vadd.f32 0.0, %v446
        %448 = vmatprep.mubr.f32.mxu0 0.0
        %449 = vmatmul.mubr.f32.gmra.mrb[0].mxu0 %v322
        %v450 = vpop.f32.mrb[0].mxu0
        %v451 = vadd.f32 0.0, %v450
        %v452 = vpop.f32.mrb[0].mxu0
        %v453 = vadd.f32 0.0, %v452
        %454 = vmatprep.mubr.f32.mxu0 0.0
        %455 = vmatmul.mubr.f32.gmra.mrb[0].mxu0 %v325
        %v456 = vpop.f32.mrb[0].mxu0
        %v457 = vadd.f32 0.0, %v456
        %v458 = vpop.f32.mrb[0].mxu0
        %v459 = vadd.f32 0.0, %v458
        %460 = vmatprep.mubr.f32.mxu0 0.0
        %461 = vmatmul.mubr.f32.gmra.mrb[0].mxu0 %v328
        %v462 = vpop.f32.mrb[0].mxu0
        %v463 = vadd.f32 0.0, %v462
        %v464 = vpop.f32.mrb[0].mxu0
        %v465 = vadd.f32 0.0, %v464
        %466 = vmatprep.mubr.f32.mxu0 0.0
        %467 = vmatmul.mubr.f32.gmra.mrb[0].mxu0 %v331
        %v468 = vpop.f32.mrb[0].mxu0
        %v469 = vadd.f32 0.0, %v468
        %v470 = vpop.f32.mrb[0].mxu0
        %v471 = vadd.f32 0.0, %v470
        %472 = vmatprep.mubr.f32.mxu0 0.0
        %473 = vmatmul.mubr.f32.gmra.mrb[0].mxu0 %v334
        %v474 = vpop.f32.mrb[0].mxu0
        %v475 = vadd.f32 0.0, %v474
        %v476 = vpop.f32.mrb[0].mxu0
        %v477 = vadd.f32 0.0, %v476
        %478 = vmatprep.mubr.f32.mxu0 0.0
        %479 = vmatmul.mubr.f32.gmra.mrb[0].mxu0 %v337
        %v480 = vpop.f32.mrb[0].mxu0
        %v481 = vadd.f32 0.0, %v480
        %v482 = vpop.f32.mrb[0].mxu0
        %v483 = vadd.f32 0.0, %v482
        %484 = vmatprep.mubr.f32.mxu0 0.0
        %485 = vmatmul.mubr.f32.gmra.mrb[0].mxu0 %v340
        %v486 = vpop.f32.mrb[0].mxu0
        %v487 = vadd.f32 0.0, %v486
        %v488 = vpop.f32.mrb[0].mxu0
        %v489 = vadd.f32 0.0, %v488
        %490 = vmatprep.mubr.f32.mxu0 0.0
        %491 = vmatmul.mubr.f32.gmra.mrb[0].mxu0 %v343
        %v492 = vpop.f32.mrb[0].mxu0
        %v493 = vadd.f32 0.0, %v492
        %v494 = vpop.f32.mrb[0].mxu0
        %v495 = vadd.f32 0.0, %v494
        %496 = vmatprep.mubr.f32.mxu0 0.0
        %497 = vmatmul.mubr.f32.gmra.mrb[0].mxu0 %v346
        %v498 = vpop.f32.mrb[0].mxu0
        %v499 = vadd.f32 0.0, %v498
        %v500 = vpop.f32.mrb[0].mxu0
        %v501 = vadd.f32 0.0, %v500
        %502 = vmatprep.mubr.f32.mxu0 0.0
        %503 = vmatmul.mubr.f32.gmra.mrb[0].mxu0 %v349
        %v504 = vpop.f32.mrb[0].mxu0
        %v505 = vadd.f32 0.0, %v504
        %v506 = vpop.f32.mrb[0].mxu0
        %v507 = vadd.f32 0.0, %v506
        %508 = vmatprep.mubr.f32.mxu0 0.0
        %509 = vmatmul.mubr.f32.gmra.mrb[0].mxu0 %v352
        %v510 = vpop.f32.mrb[0].mxu0
        %v511 = vadd.f32 0.0, %v510
        %v512 = vpop.f32.mrb[0].mxu0
        %v513 = vadd.f32 0.0, %v512
        %514 = vdwg.mxu0
        %515 = vmatprep.subr.mxu0 0.0
        %516 = vmatpush1.msra.mxu0 %v295
        %517 = vmatprep.subr.mxu0 0.0
        %518 = vmatpush1.msra.mxu0 %v298
        %519 = vmatprep.subr.mxu0 0.0
        %520 = vmatpush1.msra.mxu0 %v301
        %521 = vmatprep.subr.mxu0 0.0
        %522 = vmatpush1.msra.mxu0 %v304
        %523 = vmatprep.subr.mxu0 0.0
        %524 = vmatpush1.msra.mxu0 0.0
        %525 = vmatprep.subr.mxu0 0.0
        %526 = vmatpush1.msra.mxu0 0.0
        %527 = vmatprep.subr.mxu0 0.0
        %528 = vmatpush1.msra.mxu0 0.0
        %529 = vmatprep.subr.mxu0 0.0
        %530 = vmatpush1.msra.mxu0 0.0
        %531 = vmatprep.subr.mxu0 0.0
        %532 = vmatpush1.msra.mxu0 0.0
        %533 = vmatprep.subr.mxu0 0.0
        %534 = vmatpush1.msra.mxu0 0.0
        %535 = vmatprep.subr.mxu0 0.0
        %536 = vmatpush1.msra.mxu0 0.0
        %537 = vmatprep.subr.mxu0 0.0
        %538 = vmatpush1.msra.mxu0 0.0
        %539 = vmatprep.subr.mxu0 0.0
        %540 = vmatpush1.msra.mxu0 0.0
        %541 = vmatprep.subr.mxu0 0.0
        %542 = vmatpush1.msra.mxu0 0.0
        %543 = vmatprep.subr.mxu0 0.0
        %544 = vmatpush1.msra.mxu0 0.0
        %545 = vmatprep.subr.mxu0 0.0
        %546 = vmatpush1.msra.mxu0 0.0
        %547 = vmatprep.subr.mxu0 0.0
        %548 = vmatpush1.msra.mxu0 0.0
        %549 = vmatprep.subr.mxu0 0.0
        %550 = vmatpush1.msra.mxu0 0.0
        %551 = vmatprep.subr.mxu0 0.0
        %552 = vmatpush1.msra.mxu0 0.0
        %553 = vmatprep.subr.mxu0 0.0
        %554 = vmatpush1.msra.mxu0 0.0
        %555 = vmatprep.subr.mxu0 0.0
        %556 = vmatpush1.msra.mxu0 0.0
        %557 = vmatprep.subr.mxu0 0.0
        %558 = vmatpush1.msra.mxu0 0.0
        %559 = vmatprep.subr.mxu0 0.0
        %560 = vmatpush1.msra.mxu0 0.0
        %561 = vmatprep.subr.mxu0 0.0
        %562 = vmatpush1.msra.mxu0 0.0
        %563 = vmatprep.subr.mxu0 0.0
        %564 = vmatpush1.msra.mxu0 0.0
        %565 = vmatprep.subr.mxu0 0.0
        %566 = vmatpush1.msra.mxu0 0.0
        %567 = vmatprep.subr.mxu0 0.0
        %568 = vmatpush1.msra.mxu0 0.0
        %569 = vmatprep.subr.mxu0 0.0
        %570 = vmatpush1.msra.mxu0 0.0
        %571 = vmatprep.subr.mxu0 0.0
        %572 = vmatpush1.msra.mxu0 0.0
        %573 = vmatprep.subr.mxu0 0.0
        %574 = vmatpush1.msra.mxu0 0.0
        %575 = vmatprep.subr.mxu0 0.0
        %576 = vmatpush1.msra.mxu0 0.0
        %577 = vmatprep.subr.mxu0 0.0
        %578 = vmatpush1.msra.mxu0 0.0
        %579 = vmatprep.mubr.f32.mxu0 0.0
        %580 = vmatmul.mubr.f32.gmra.mrb[0].mxu0 %v307
        %v581 = vpop.f32.mrb[0].mxu0
        %v582 = vadd.f32 0.0, %v581
        %v583 = vpop.f32.mrb[0].mxu0
        %584 = vmatprep.mubr.f32.mxu0 0.0
        %585 = vmatmul.mubr.f32.gmra.mrb[0].mxu0 %v310
        %v586 = vpop.f32.mrb[0].mxu0
        %v587 = vadd.f32 0.0, %v586
        %v588 = vpop.f32.mrb[0].mxu0
        %589 = vmatprep.mubr.f32.mxu0 0.0
        %590 = vmatmul.mubr.f32.gmra.mrb[0].mxu0 %v313
        %v591 = vpop.f32.mrb[0].mxu0
        %v592 = vadd.f32 0.0, %v591
        %v593 = vpop.f32.mrb[0].mxu0
        %594 = vmatprep.mubr.f32.mxu0 0.0
        %595 = vmatmul.mubr.f32.gmra.mrb[0].mxu0 %v316
        %v596 = vpop.f32.mrb[0].mxu0
        %v597 = vadd.f32 0.0, %v596
        %v598 = vpop.f32.mrb[0].mxu0
        %599 = vmatprep.mubr.f32.mxu0 0.0
        %600 = vmatmul.mubr.f32.gmra.mrb[0].mxu0 %v319
        %v601 = vpop.f32.mrb[0].mxu0
        %v602 = vadd.f32 0.0, %v601
        %v603 = vpop.f32.mrb[0].mxu0
        %604 = vmatprep.mubr.f32.mxu0 0.0
        %605 = vmatmul.mubr.f32.gmra.mrb[0].mxu0 %v322
        %v606 = vpop.f32.mrb[0].mxu0
        %v607 = vadd.f32 0.0, %v606
        %v608 = vpop.f32.mrb[0].mxu0
        %609 = vmatprep.mubr.f32.mxu0 0.0
        %610 = vmatmul.mubr.f32.gmra.mrb[0].mxu0 %v325
        %v611 = vpop.f32.mrb[0].mxu0
        %v612 = vadd.f32 0.0, %v611
        %v613 = vpop.f32.mrb[0].mxu0
        %614 = vmatprep.mubr.f32.mxu0 0.0
        %615 = vmatmul.mubr.f32.gmra.mrb[0].mxu0 %v328
        %v616 = vpop.f32.mrb[0].mxu0
        %v617 = vadd.f32 0.0, %v616
        %v618 = vpop.f32.mrb[0].mxu0
        %619 = vmatprep.mubr.f32.mxu0 0.0
        %620 = vmatmul.mubr.f32.gmra.mrb[0].mxu0 %v331
        %v621 = vpop.f32.mrb[0].mxu0
        %v622 = vadd.f32 0.0, %v621
        %v623 = vpop.f32.mrb[0].mxu0
        %624 = vmatprep.mubr.f32.mxu0 0.0
        %625 = vmatmul.mubr.f32.gmra.mrb[0].mxu0 %v334
        %v626 = vpop.f32.mrb[0].mxu0
        %v627 = vadd.f32 0.0, %v626
        %v628 = vpop.f32.mrb[0].mxu0
        %629 = vmatprep.mubr.f32.mxu0 0.0
        %630 = vmatmul.mubr.f32.gmra.mrb[0].mxu0 %v337
        %v631 = vpop.f32.mrb[0].mxu0
        %v632 = vadd.f32 0.0, %v631
        %v633 = vpop.f32.mrb[0].mxu0
        %634 = vmatprep.mubr.f32.mxu0 0.0
        %635 = vmatmul.mubr.f32.gmra.mrb[0].mxu0 %v340
        %v636 = vpop.f32.mrb[0].mxu0
        %v637 = vadd.f32 0.0, %v636
        %v638 = vpop.f32.mrb[0].mxu0
        %639 = vmatprep.mubr.f32.mxu0 0.0
        %640 = vmatmul.mubr.f32.gmra.mrb[0].mxu0 %v343
        %v641 = vpop.f32.mrb[0].mxu0
        %v642 = vadd.f32 0.0, %v641
        %v643 = vpop.f32.mrb[0].mxu0
        %644 = vmatprep.mubr.f32.mxu0 0.0
        %645 = vmatmul.mubr.f32.gmra.mrb[0].mxu0 %v346
        %v646 = vpop.f32.mrb[0].mxu0
        %v647 = vadd.f32 0.0, %v646
        %v648 = vpop.f32.mrb[0].mxu0
        %649 = vmatprep.mubr.f32.mxu0 0.0
        %650 = vmatmul.mubr.f32.gmra.mrb[0].mxu0 %v349
        %v651 = vpop.f32.mrb[0].mxu0
        %v652 = vadd.f32 0.0, %v651
        %v653 = vpop.f32.mrb[0].mxu0
        %654 = vmatprep.mubr.f32.mxu0 0.0
        %655 = vmatmul.mubr.f32.gmra.mrb[0].mxu0 %v352
        %v656 = vpop.f32.mrb[0].mxu0
        %v657 = vadd.f32 0.0, %v656
        %v658 = vpop.f32.mrb[0].mxu0
        %659 = vdwg.mxu0
        %v660 = vld [vmem:[%s3] sm:$0x7]
        %vm661 = vcmp.eq.s32.totalorder %v277, 0
        %vm662 = vcmp.eq.s32.totalorder %v278, 0
        %vm663 = vcmp.eq.s32.totalorder %v279, 0
        %vm664 = vcmp.eq.s32.totalorder %v280, 0
        %vm665 = vcmp.eq.s32.totalorder %v281, 0
        %vm666 = vcmp.eq.s32.totalorder %v282, 0
        %vm667 = vcmp.eq.s32.totalorder %v283, 0
        %vm668 = vcmp.eq.s32.totalorder %v284, 0
        %vm669 = vcmp.eq.s32.totalorder %v285, 0
        %vm670 = vcmp.eq.s32.totalorder %v286, 0
        %vm671 = vcmp.eq.s32.totalorder %v287, 0
        %vm672 = vcmp.eq.s32.totalorder %v288, 0
        %vm673 = vcmp.eq.s32.totalorder %v289, 0
        %vm674 = vcmp.eq.s32.totalorder %v290, 0
        %vm675 = vcmp.eq.s32.totalorder %v291, 0
        %vm676 = vcmp.eq.s32.totalorder %v292, 0
        %v677 = vsel %vm661, 1, 0
        %v678 = vsel %vm662, 1, 0
        %v679 = vsel %vm663, 1, 0
        %v680 = vsel %vm664, 1, 0
        %v681 = vsel %vm665, 1, 0
        %v682 = vsel %vm666, 1, 0
        %v683 = vsel %vm667, 1, 0
        %v684 = vsel %vm668, 1, 0
        %v685 = vsel %vm669, 1, 0
        %v686 = vsel %vm670, 1, 0
        %v687 = vsel %vm671, 1, 0
        %v688 = vsel %vm672, 1, 0
        %v689 = vsel %vm673, 1, 0
        %v690 = vsel %vm674, 1, 0
        %v691 = vsel %vm675, 1, 0
        %v692 = vsel %vm676, 1, 0
        %v693 = vcvt.s32.f32 %v677
        %v694 = vcvt.s32.f32 %v678
        %v695 = vcvt.s32.f32 %v679
        %v696 = vcvt.s32.f32 %v680
        %v697 = vcvt.s32.f32 %v681
        %v698 = vcvt.s32.f32 %v682
        %v699 = vcvt.s32.f32 %v683
        %v700 = vcvt.s32.f32 %v684
        %v701 = vcvt.s32.f32 %v685
        %v702 = vcvt.s32.f32 %v686
        %v703 = vcvt.s32.f32 %v687
        %v704 = vcvt.s32.f32 %v688
        %v705 = vcvt.s32.f32 %v689
        %v706 = vcvt.s32.f32 %v690
        %v707 = vcvt.s32.f32 %v691
        %v708 = vcvt.s32.f32 %v692
        %v709 = vlaneseq
        %v710 = vshrl.u32 %v709, 7
        %v711 = vsub.s32 0, %v710
        %v712 = vrot.slane %v660, %v711
        %v713 = vadd.f32 %v421, %v712
        %v714 = vadd.f32 %v427, %v712
        %v715 = vadd.f32 %v433, %v712
        %v716 = vadd.f32 %v439, %v712
        %v717 = vadd.f32 %v445, %v712
        %v718 = vadd.f32 %v451, %v712
        %v719 = vadd.f32 %v457, %v712
        %v720 = vadd.f32 %v463, %v712
        %v721 = vadd.f32 %v469, %v712
        %v722 = vadd.f32 %v475, %v712
        %v723 = vadd.f32 %v481, %v712
        %v724 = vadd.f32 %v487, %v712
        %v725 = vadd.f32 %v493, %v712
        %v726 = vadd.f32 %v499, %v712
        %v727 = vadd.f32 %v505, %v712
        %v728 = vadd.f32 %v511, %v712
        %730 = vset.pattern.permute.xlu0 0
        %731 = vperm.xlu0 %730, %v693
        %v732 = vpop.permute.xlu0 %731
        %735 = vset.pattern.permute.xlu0 0
        %736 = vperm.xlu0 %735, %v694
        %v737 = vpop.permute.xlu0 %736
        %740 = vset.pattern.permute.xlu0 0
        %741 = vperm.xlu0 %740, %v695
        %v742 = vpop.permute.xlu0 %741
        %745 = vset.pattern.permute.xlu0 0
        %746 = vperm.xlu0 %745, %v696
        %v747 = vpop.permute.xlu0 %746
        %750 = vset.pattern.permute.xlu0 0
        %751 = vperm.xlu0 %750, %v697
        %v752 = vpop.permute.xlu0 %751
        %755 = vset.pattern.permute.xlu0 0
        %756 = vperm.xlu0 %755, %v698
        %v757 = vpop.permute.xlu0 %756
        %760 = vset.pattern.permute.xlu0 0
        %761 = vperm.xlu0 %760, %v699
        %v762 = vpop.permute.xlu0 %761
        %765 = vset.pattern.permute.xlu0 0
        %766 = vperm.xlu0 %765, %v700
        %v767 = vpop.permute.xlu0 %766
        %770 = vset.pattern.permute.xlu0 0
        %771 = vperm.xlu0 %770, %v701
        %v772 = vpop.permute.xlu0 %771
        %775 = vset.pattern.permute.xlu0 0
        %776 = vperm.xlu0 %775, %v702
        %v777 = vpop.permute.xlu0 %776
        %780 = vset.pattern.permute.xlu0 0
        %781 = vperm.xlu0 %780, %v703
        %v782 = vpop.permute.xlu0 %781
        %785 = vset.pattern.permute.xlu0 0
        %786 = vperm.xlu0 %785, %v704
        %v787 = vpop.permute.xlu0 %786
        %790 = vset.pattern.permute.xlu0 0
        %791 = vperm.xlu0 %790, %v705
        %v792 = vpop.permute.xlu0 %791
        %795 = vset.pattern.permute.xlu0 0
        %796 = vperm.xlu0 %795, %v706
        %v797 = vpop.permute.xlu0 %796
        %800 = vset.pattern.permute.xlu0 0
        %801 = vperm.xlu0 %800, %v707
        %v802 = vpop.permute.xlu0 %801
        %805 = vset.pattern.permute.xlu0 0
        %806 = vperm.xlu0 %805, %v708
        %v807 = vpop.permute.xlu0 %806
        %v809 = vmul.f32 %v732, %v713
        %v810 = vmul.f32 %v737, %v714
        %v811 = vmul.f32 %v742, %v715
        %v812 = vmul.f32 %v747, %v716
        %v813 = vmul.f32 %v752, %v717
        %v814 = vmul.f32 %v757, %v718
        %v815 = vmul.f32 %v762, %v719
        %v816 = vmul.f32 %v767, %v720
        %v817 = vmul.f32 %v772, %v721
        %v818 = vmul.f32 %v777, %v722
        %v819 = vmul.f32 %v782, %v723
        %v820 = vmul.f32 %v787, %v724
        %v821 = vmul.f32 %v792, %v725
        %v822 = vmul.f32 %v797, %v726
        %v823 = vmul.f32 %v802, %v727
        %v824 = vmul.f32 %v807, %v728
        %v825 = vadd.f32 %v809, 0.0
        %v826 = vadd.f32 %v810, 0.0
        %v827 = vadd.f32 %v811, 0.0
        %v828 = vadd.f32 %v812, 0.0
        %v829 = vadd.f32 %v813, 0.0
        %v830 = vadd.f32 %v814, 0.0
        %v831 = vadd.f32 %v815, 0.0
        %v832 = vadd.f32 %v816, 0.0
        %v833 = vadd.f32 %v817, 0.0
        %v834 = vadd.f32 %v818, 0.0
        %v835 = vadd.f32 %v819, 0.0
        %v836 = vadd.f32 %v820, 0.0
        %v837 = vadd.f32 %v821, 0.0
        %v838 = vadd.f32 %v822, 0.0
        %v839 = vadd.f32 %v823, 0.0
        %v840 = vadd.f32 %v824, 0.0
        %vm841 = vcmp.eq.s32.totalorder %v277, 1
        %vm842 = vcmp.eq.s32.totalorder %v278, 1
        %vm843 = vcmp.eq.s32.totalorder %v279, 1
        %vm844 = vcmp.eq.s32.totalorder %v280, 1
        %vm845 = vcmp.eq.s32.totalorder %v281, 1
        %vm846 = vcmp.eq.s32.totalorder %v282, 1
        %vm847 = vcmp.eq.s32.totalorder %v283, 1
        %vm848 = vcmp.eq.s32.totalorder %v284, 1
        %vm849 = vcmp.eq.s32.totalorder %v285, 1
        %vm850 = vcmp.eq.s32.totalorder %v286, 1
        %vm851 = vcmp.eq.s32.totalorder %v287, 1
        %vm852 = vcmp.eq.s32.totalorder %v288, 1
        %vm853 = vcmp.eq.s32.totalorder %v289, 1
        %vm854 = vcmp.eq.s32.totalorder %v290, 1
        %vm855 = vcmp.eq.s32.totalorder %v291, 1
        %vm856 = vcmp.eq.s32.totalorder %v292, 1
        %v857 = vsel %vm841, 1, 0
        %v858 = vsel %vm842, 1, 0
        %v859 = vsel %vm843, 1, 0
        %v860 = vsel %vm844, 1, 0
        %v861 = vsel %vm845, 1, 0
        %v862 = vsel %vm846, 1, 0
        %v863 = vsel %vm847, 1, 0
        %v864 = vsel %vm848, 1, 0
        %v865 = vsel %vm849, 1, 0
        %v866 = vsel %vm850, 1, 0
        %v867 = vsel %vm851, 1, 0
        %v868 = vsel %vm852, 1, 0
        %v869 = vsel %vm853, 1, 0
        %v870 = vsel %vm854, 1, 0
        %v871 = vsel %vm855, 1, 0
        %v872 = vsel %vm856, 1, 0
        %v873 = vcvt.s32.f32 %v857
        %v874 = vcvt.s32.f32 %v858
        %v875 = vcvt.s32.f32 %v859
        %v876 = vcvt.s32.f32 %v860
        %v877 = vcvt.s32.f32 %v861
        %v878 = vcvt.s32.f32 %v862
        %v879 = vcvt.s32.f32 %v863
        %v880 = vcvt.s32.f32 %v864
        %v881 = vcvt.s32.f32 %v865
        %v882 = vcvt.s32.f32 %v866
        %v883 = vcvt.s32.f32 %v867
        %v884 = vcvt.s32.f32 %v868
        %v885 = vcvt.s32.f32 %v869
        %v886 = vcvt.s32.f32 %v870
        %v887 = vcvt.s32.f32 %v871
        %v888 = vcvt.s32.f32 %v872
        %v889 = vlaneseq
        %v890 = vshrl.u32 %v889, 7
        %v891 = vsub.s32 1, %v890
        %v892 = vrot.slane %v660, %v891
        %v893 = vadd.f32 %v423, %v892
        %v894 = vadd.f32 %v429, %v892
        %v895 = vadd.f32 %v435, %v892
        %v896 = vadd.f32 %v441, %v892
        %v897 = vadd.f32 %v447, %v892
        %v898 = vadd.f32 %v453, %v892
        %v899 = vadd.f32 %v459, %v892
        %v900 = vadd.f32 %v465, %v892
        %v901 = vadd.f32 %v471, %v892
        %v902 = vadd.f32 %v477, %v892
        %v903 = vadd.f32 %v483, %v892
        %v904 = vadd.f32 %v489, %v892
        %v905 = vadd.f32 %v495, %v892
        %v906 = vadd.f32 %v501, %v892
        %v907 = vadd.f32 %v507, %v892
        %v908 = vadd.f32 %v513, %v892
        %910 = vset.pattern.permute.xlu0 0
        %911 = vperm.xlu0 %910, %v873
        %v912 = vpop.permute.xlu0 %911
        %915 = vset.pattern.permute.xlu0 0
        %916 = vperm.xlu0 %915, %v874
        %v917 = vpop.permute.xlu0 %916
        %920 = vset.pattern.permute.xlu0 0
        %921 = vperm.xlu0 %920, %v875
        %v922 = vpop.permute.xlu0 %921
        %925 = vset.pattern.permute.xlu0 0
        %926 = vperm.xlu0 %925, %v876
        %v927 = vpop.permute.xlu0 %926
        %930 = vset.pattern.permute.xlu0 0
        %931 = vperm.xlu0 %930, %v877
        %v932 = vpop.permute.xlu0 %931
        %935 = vset.pattern.permute.xlu0 0
        %936 = vperm.xlu0 %935, %v878
        %v937 = vpop.permute.xlu0 %936
        %940 = vset.pattern.permute.xlu0 0
        %941 = vperm.xlu0 %940, %v879
        %v942 = vpop.permute.xlu0 %941
        %945 = vset.pattern.permute.xlu0 0
        %946 = vperm.xlu0 %945, %v880
        %v947 = vpop.permute.xlu0 %946
        %950 = vset.pattern.permute.xlu0 0
        %951 = vperm.xlu0 %950, %v881
        %v952 = vpop.permute.xlu0 %951
        %955 = vset.pattern.permute.xlu0 0
        %956 = vperm.xlu0 %955, %v882
        %v957 = vpop.permute.xlu0 %956
        %960 = vset.pattern.permute.xlu0 0
        %961 = vperm.xlu0 %960, %v883
        %v962 = vpop.permute.xlu0 %961
        %965 = vset.pattern.permute.xlu0 0
        %966 = vperm.xlu0 %965, %v884
        %v967 = vpop.permute.xlu0 %966
        %970 = vset.pattern.permute.xlu0 0
        %971 = vperm.xlu0 %970, %v885
        %v972 = vpop.permute.xlu0 %971
        %975 = vset.pattern.permute.xlu0 0
        %976 = vperm.xlu0 %975, %v886
        %v977 = vpop.permute.xlu0 %976
        %980 = vset.pattern.permute.xlu0 0
        %981 = vperm.xlu0 %980, %v887
        %v982 = vpop.permute.xlu0 %981
        %985 = vset.pattern.permute.xlu0 0
        %986 = vperm.xlu0 %985, %v888
        %v987 = vpop.permute.xlu0 %986
        %v989 = vmul.f32 %v912, %v893
        %v990 = vmul.f32 %v917, %v894
        %v991 = vmul.f32 %v922, %v895
        %v992 = vmul.f32 %v927, %v896
        %v993 = vmul.f32 %v932, %v897
        %v994 = vmul.f32 %v937, %v898
        %v995 = vmul.f32 %v942, %v899
        %v996 = vmul.f32 %v947, %v900
        %v997 = vmul.f32 %v952, %v901
        %v998 = vmul.f32 %v957, %v902
        %v999 = vmul.f32 %v962, %v903
        %v1000 = vmul.f32 %v967, %v904
        %v1001 = vmul.f32 %v972, %v905
        %v1002 = vmul.f32 %v977, %v906
        %v1003 = vmul.f32 %v982, %v907
        %v1004 = vmul.f32 %v987, %v908
        %v1005 = vadd.f32 %v825, %v989
        %v1006 = vadd.f32 %v826, %v990
        %v1007 = vadd.f32 %v827, %v991
        %v1008 = vadd.f32 %v828, %v992
        %v1009 = vadd.f32 %v829, %v993
        %v1010 = vadd.f32 %v830, %v994
        %v1011 = vadd.f32 %v831, %v995
        %v1012 = vadd.f32 %v832, %v996
        %v1013 = vadd.f32 %v833, %v997
        %v1014 = vadd.f32 %v834, %v998
        %v1015 = vadd.f32 %v835, %v999
        %v1016 = vadd.f32 %v836, %v1000
        %v1017 = vadd.f32 %v837, %v1001
        %v1018 = vadd.f32 %v838, %v1002
        %v1019 = vadd.f32 %v839, %v1003
        %v1020 = vadd.f32 %v840, %v1004
        %vm1021 = vcmp.eq.s32.totalorder %v277, 2
        %vm1022 = vcmp.eq.s32.totalorder %v278, 2
        %vm1023 = vcmp.eq.s32.totalorder %v279, 2
        %vm1024 = vcmp.eq.s32.totalorder %v280, 2
        %vm1025 = vcmp.eq.s32.totalorder %v281, 2
        %vm1026 = vcmp.eq.s32.totalorder %v282, 2
        %vm1027 = vcmp.eq.s32.totalorder %v283, 2
        %vm1028 = vcmp.eq.s32.totalorder %v284, 2
        %vm1029 = vcmp.eq.s32.totalorder %v285, 2
        %vm1030 = vcmp.eq.s32.totalorder %v286, 2
        %vm1031 = vcmp.eq.s32.totalorder %v287, 2
        %vm1032 = vcmp.eq.s32.totalorder %v288, 2
        %vm1033 = vcmp.eq.s32.totalorder %v289, 2
        %vm1034 = vcmp.eq.s32.totalorder %v290, 2
        %vm1035 = vcmp.eq.s32.totalorder %v291, 2
        %vm1036 = vcmp.eq.s32.totalorder %v292, 2
        %v1037 = vsel %vm1021, 1, 0
        %v1038 = vsel %vm1022, 1, 0
        %v1039 = vsel %vm1023, 1, 0
        %v1040 = vsel %vm1024, 1, 0
        %v1041 = vsel %vm1025, 1, 0
        %v1042 = vsel %vm1026, 1, 0
        %v1043 = vsel %vm1027, 1, 0
        %v1044 = vsel %vm1028, 1, 0
        %v1045 = vsel %vm1029, 1, 0
        %v1046 = vsel %vm1030, 1, 0
        %v1047 = vsel %vm1031, 1, 0
        %v1048 = vsel %vm1032, 1, 0
        %v1049 = vsel %vm1033, 1, 0
        %v1050 = vsel %vm1034, 1, 0
        %v1051 = vsel %vm1035, 1, 0
        %v1052 = vsel %vm1036, 1, 0
        %v1053 = vcvt.s32.f32 %v1037
        %v1054 = vcvt.s32.f32 %v1038
        %v1055 = vcvt.s32.f32 %v1039
        %v1056 = vcvt.s32.f32 %v1040
        %v1057 = vcvt.s32.f32 %v1041
        %v1058 = vcvt.s32.f32 %v1042
        %v1059 = vcvt.s32.f32 %v1043
        %v1060 = vcvt.s32.f32 %v1044
        %v1061 = vcvt.s32.f32 %v1045
        %v1062 = vcvt.s32.f32 %v1046
        %v1063 = vcvt.s32.f32 %v1047
        %v1064 = vcvt.s32.f32 %v1048
        %v1065 = vcvt.s32.f32 %v1049
        %v1066 = vcvt.s32.f32 %v1050
        %v1067 = vcvt.s32.f32 %v1051
        %v1068 = vcvt.s32.f32 %v1052
        %v1069 = vlaneseq
        %v1070 = vshrl.u32 %v1069, 7
        %v1071 = vsub.s32 2, %v1070
        %v1072 = vrot.slane %v660, %v1071
        %v1073 = vadd.f32 %v582, %v1072
        %v1074 = vadd.f32 %v587, %v1072
        %v1075 = vadd.f32 %v592, %v1072
        %v1076 = vadd.f32 %v597, %v1072
        %v1077 = vadd.f32 %v602, %v1072
        %v1078 = vadd.f32 %v607, %v1072
        %v1079 = vadd.f32 %v612, %v1072
        %v1080 = vadd.f32 %v617, %v1072
        %v1081 = vadd.f32 %v622, %v1072
        %v1082 = vadd.f32 %v627, %v1072
        %v1083 = vadd.f32 %v632, %v1072
        %v1084 = vadd.f32 %v637, %v1072
        %v1085 = vadd.f32 %v642, %v1072
        %v1086 = vadd.f32 %v647, %v1072
        %v1087 = vadd.f32 %v652, %v1072
        %v1088 = vadd.f32 %v657, %v1072
        %1090 = vset.pattern.permute.xlu0 0
        %1091 = vperm.xlu0 %1090, %v1053
        %v1092 = vpop.permute.xlu0 %1091
        %1095 = vset.pattern.permute.xlu0 0
        %1096 = vperm.xlu0 %1095, %v1054
        %v1097 = vpop.permute.xlu0 %1096
        %1100 = vset.pattern.permute.xlu0 0
        %1101 = vperm.xlu0 %1100, %v1055
        %v1102 = vpop.permute.xlu0 %1101
        %1105 = vset.pattern.permute.xlu0 0
        %1106 = vperm.xlu0 %1105, %v1056
        %v1107 = vpop.permute.xlu0 %1106
        %1110 = vset.pattern.permute.xlu0 0
        %1111 = vperm.xlu0 %1110, %v1057
        %v1112 = vpop.permute.xlu0 %1111
        %1115 = vset.pattern.permute.xlu0 0
        %1116 = vperm.xlu0 %1115, %v1058
        %v1117 = vpop.permute.xlu0 %1116
        %1120 = vset.pattern.permute.xlu0 0
        %1121 = vperm.xlu0 %1120, %v1059
        %v1122 = vpop.permute.xlu0 %1121
        %1125 = vset.pattern.permute.xlu0 0
        %1126 = vperm.xlu0 %1125, %v1060
        %v1127 = vpop.permute.xlu0 %1126
        %1130 = vset.pattern.permute.xlu0 0
        %1131 = vperm.xlu0 %1130, %v1061
        %v1132 = vpop.permute.xlu0 %1131
        %1135 = vset.pattern.permute.xlu0 0
        %1136 = vperm.xlu0 %1135, %v1062
        %v1137 = vpop.permute.xlu0 %1136
        %1140 = vset.pattern.permute.xlu0 0
        %1141 = vperm.xlu0 %1140, %v1063
        %v1142 = vpop.permute.xlu0 %1141
        %1145 = vset.pattern.permute.xlu0 0
        %1146 = vperm.xlu0 %1145, %v1064
        %v1147 = vpop.permute.xlu0 %1146
        %1150 = vset.pattern.permute.xlu0 0
        %1151 = vperm.xlu0 %1150, %v1065
        %v1152 = vpop.permute.xlu0 %1151
        %1155 = vset.pattern.permute.xlu0 0
        %1156 = vperm.xlu0 %1155, %v1066
        %v1157 = vpop.permute.xlu0 %1156
        %1160 = vset.pattern.permute.xlu0 0
        %1161 = vperm.xlu0 %1160, %v1067
        %v1162 = vpop.permute.xlu0 %1161
        %1165 = vset.pattern.permute.xlu0 0
        %1166 = vperm.xlu0 %1165, %v1068
        %v1167 = vpop.permute.xlu0 %1166
        %v1169 = vmul.f32 %v1092, %v1073
        %v1170 = vmul.f32 %v1097, %v1074
        %v1171 = vmul.f32 %v1102, %v1075
        %v1172 = vmul.f32 %v1107, %v1076
        %v1173 = vmul.f32 %v1112, %v1077
        %v1174 = vmul.f32 %v1117, %v1078
        %v1175 = vmul.f32 %v1122, %v1079
        %v1176 = vmul.f32 %v1127, %v1080
        %v1177 = vmul.f32 %v1132, %v1081
        %v1178 = vmul.f32 %v1137, %v1082
        %v1179 = vmul.f32 %v1142, %v1083
        %v1180 = vmul.f32 %v1147, %v1084
        %v1181 = vmul.f32 %v1152, %v1085
        %v1182 = vmul.f32 %v1157, %v1086
        %v1183 = vmul.f32 %v1162, %v1087
        %v1184 = vmul.f32 %v1167, %v1088
        %v1185 = vadd.f32 %v1005, %v1169
        %v1186 = vadd.f32 %v1006, %v1170
        %v1187 = vadd.f32 %v1007, %v1171
        %v1188 = vadd.f32 %v1008, %v1172
        %v1189 = vadd.f32 %v1009, %v1173
        %v1190 = vadd.f32 %v1010, %v1174
        %v1191 = vadd.f32 %v1011, %v1175
        %v1192 = vadd.f32 %v1012, %v1176
        %v1193 = vadd.f32 %v1013, %v1177
        %v1194 = vadd.f32 %v1014, %v1178
        %v1195 = vadd.f32 %v1015, %v1179
        %v1196 = vadd.f32 %v1016, %v1180
        %v1197 = vadd.f32 %v1017, %v1181
        %v1198 = vadd.f32 %v1018, %v1182
        %v1199 = vadd.f32 %v1019, %v1183
        %v1200 = vadd.f32 %v1020, %v1184
        %1201 = vst.msk [vmem:[%s227] sm:$0xff] %vm305, %v1185
        %1202 = vst.msk [vmem:[%s227 + $0x8] sm:$0xff] %vm305, %v1186
        %1203 = vst.msk [vmem:[%s227 + $0x10] sm:$0xff] %vm305, %v1187
        %1204 = vst.msk [vmem:[%s227 + $0x18] sm:$0xff] %vm305, %v1188
        %1205 = vst.msk [vmem:[%s227 + $0x20] sm:$0xff] %vm305, %v1189
        %1206 = vst.msk [vmem:[%s227 + $0x28] sm:$0xff] %vm305, %v1190
        %1207 = vst.msk [vmem:[%s227 + $0x30] sm:$0xff] %vm305, %v1191
        %1208 = vst.msk [vmem:[%s227 + $0x38] sm:$0xff] %vm305, %v1192
        %1209 = vst.msk [vmem:[%s227 + $0x40] sm:$0xff] %vm305, %v1193
        %1210 = vst.msk [vmem:[%s227 + $0x48] sm:$0xff] %vm305, %v1194
        %1211 = vst.msk [vmem:[%s227 + $0x50] sm:$0xff] %vm305, %v1195
        %1212 = vst.msk [vmem:[%s227 + $0x58] sm:$0xff] %vm305, %v1196
        %1213 = vst.msk [vmem:[%s227 + $0x60] sm:$0xff] %vm305, %v1197
        %1214 = vst.msk [vmem:[%s227 + $0x68] sm:$0xff] %vm305, %v1198
        %1215 = vst.msk [vmem:[%s227 + $0x70] sm:$0xff] %vm305, %v1199
        %1216 = vst.msk [vmem:[%s227 + $0x78] sm:$0xff] %vm305, %v1200
        %s1217 = sand.u32 %s117, 1
        %s1218 = sand.u32 %s117, 1
        %s1219 = smul.addr %s1218, 128
        %s1220 = scalar_lea.vmem [#allocation2], %s1219
        // Predicated region
        $region37: #{tpu_custom_call.1} parent=35 // pred_check
          %p1221 = pneg %p127
        $region38: #{tpu_custom_call.1} parent=35 // pred_check_branch
          %1223 = sbr.rel (%p1221) target = $region40
        $region39: #{tpu_custom_call.1} parent=35 // pred_region
          %s1224 = smul.u32 16, %s15
          %s1225 = ssub.s32 125, %s1224
          %p1226 = scmp.lt.s32.totalorder %s1225, 16
          %s1227 = scalar_select %p1226, %s1225, 16
          %s1228 = smul.u32 128, %s1227
          %p1229 = scmp.ne.s32.totalorder 0, %s1228
          %s1230 = smul.addr %s1224, 8
          %s1231 = scalar_lea.vmem %s4, %s1230
          // Predicated region
          $region41: #{tpu_custom_call.1} parent=39 // pred_check
            %p1232 = pneg %p1229
          $region42: #{tpu_custom_call.1} parent=39 // pred_check_branch
            %1234 = sbr.rel (%p1232) target = $region44
          $region43: #{tpu_custom_call.1} parent=39 // pred_region
            // Predicated region
            $region45: #{tpu_custom_call.1} parent=43 // pred_check
              _
            $region46: #{tpu_custom_call.1} parent=43 // pred_check_branch
              %1236 = sbr.rel (0) target = $region48
            $region47: #{tpu_custom_call.1} parent=43 // pred_region
              // Predicated region
              $region67: #{tpu_custom_call.1} parent=47 // pred_check
                _
              $region68: #{tpu_custom_call.1} parent=47 // pred_check_branch
                %1315 = sbr.rel (0) target = $region70
              $region69: #{tpu_custom_call.1} parent=47 // pred_region
                %s1316 = sshrl.u32 %s1227, 4
                // While loop
                $region71: #{tpu_custom_call.1} parent=69 // loop_pre_header
                  _
                $region72: #{tpu_custom_call.1} parent=69 // loop_header
                  %s1318 = sphi 0, %s1320
                  %p1319 = scmp.ge.s32.totalorder %s1318, %s1316
                  %s1323 = sphi 0, %s1360
                  %s1324 = sphi %s1220, %s1363
                  %s1325 = sphi %s1231, %s1364
                $region73: #{tpu_custom_call.1} parent=69 // loop_header_branch
                  %1322 = sbr.rel (%p1319) target = $region77
                $region74: #{tpu_custom_call.1} parent=69 // loop_body
                  %v1326 = vld [vmem:[%s1324] sm:$0xff]
                  %1327 = vst [vmem:[%s1325] sm:$0xff] %v1326
                  %v1328 = vld [vmem:[%s1324 + $0x8] sm:$0xff]
                  %1329 = vst [vmem:[%s1325 + $0x8] sm:$0xff] %v1328
                  %v1330 = vld [vmem:[%s1324 + $0x10] sm:$0xff]
                  %1331 = vst [vmem:[%s1325 + $0x10] sm:$0xff] %v1330
                  %v1332 = vld [vmem:[%s1324 + $0x18] sm:$0xff]
                  %1333 = vst [vmem:[%s1325 + $0x18] sm:$0xff] %v1332
                  %v1334 = vld [vmem:[%s1324 + $0x20] sm:$0xff]
                  %1335 = vst [vmem:[%s1325 + $0x20] sm:$0xff] %v1334
                  %v1336 = vld [vmem:[%s1324 + $0x28] sm:$0xff]
                  %1337 = vst [vmem:[%s1325 + $0x28] sm:$0xff] %v1336
                  %v1338 = vld [vmem:[%s1324 + $0x30] sm:$0xff]
                  %1339 = vst [vmem:[%s1325 + $0x30] sm:$0xff] %v1338
                  %v1340 = vld [vmem:[%s1324 + $0x38] sm:$0xff]
                  %1341 = vst [vmem:[%s1325 + $0x38] sm:$0xff] %v1340
                  %v1342 = vld [vmem:[%s1324 + $0x40] sm:$0xff]
                  %1343 = vst [vmem:[%s1325 + $0x40] sm:$0xff] %v1342
                  %v1344 = vld [vmem:[%s1324 + $0x48] sm:$0xff]
                  %1345 = vst [vmem:[%s1325 + $0x48] sm:$0xff] %v1344
                  %v1346 = vld [vmem:[%s1324 + $0x50] sm:$0xff]
                  %1347 = vst [vmem:[%s1325 + $0x50] sm:$0xff] %v1346
                  %v1348 = vld [vmem:[%s1324 + $0x58] sm:$0xff]
                  %1349 = vst [vmem:[%s1325 + $0x58] sm:$0xff] %v1348
                  %v1350 = vld [vmem:[%s1324 + $0x60] sm:$0xff]
                  %1351 = vst [vmem:[%s1325 + $0x60] sm:$0xff] %v1350
                  %v1352 = vld [vmem:[%s1324 + $0x68] sm:$0xff]
                  %1353 = vst [vmem:[%s1325 + $0x68] sm:$0xff] %v1352
                  %v1354 = vld [vmem:[%s1324 + $0x70] sm:$0xff]
                  %1355 = vst [vmem:[%s1325 + $0x70] sm:$0xff] %v1354
                  %v1356 = vld [vmem:[%s1324 + $0x78] sm:$0xff]
                  %1357 = vst [vmem:[%s1325 + $0x78] sm:$0xff] %v1356
                  %s1358 = sadd.s32 1, %s1323
                  %p1359 = scmp.ge.s32.totalorder %s1358, %s1316
                  %s1360 = scalar_select %p1359, 0, %s1358
                  %s1361 = smul.u32 %s1360, 128
                  %s1362 = smul.u32 %s1360, 128
                  %s1363 = scalar_lea.vmem %s1220, %s1361 [#allocation2]
                  %s1364 = scalar_lea.vmem %s1231, %s1362
                $region75: #{tpu_custom_call.1} parent=69 // loop_footer
                  %s1320 = sadd.s32 %s1318, 1
                $region76: #{tpu_custom_call.1} parent=69 // loop_footer_branch
                  %1317 = sbr.rel target = $region72
                $region77: #{tpu_custom_call.1} parent=69 // loop_exit
                  _
                %s1365 = sshrl.u32 %s1227, 4
                %s1366 = sand.u32 %s1227, 15
                %s1367 = smul.u32 %s1365, 16
                %s1368 = smul.u32 8, %s1367
                %s1369 = scalar_lea.vmem %s1220, %s1368 [#allocation2]
                %s1370 = smul.u32 8, %s1367
                %s1371 = scalar_lea.vmem %s1231, %s1370
                // While loop
                $region78: #{tpu_custom_call.1} parent=69 // loop_pre_header
                  _
                $region79: #{tpu_custom_call.1} parent=69 // loop_header
                  %s1373 = sphi 0, %s1375
                  %p1374 = scmp.ge.s32.totalorder %s1373, %s1366
                  %s1378 = sphi 0, %s1385
                  %s1379 = sphi %s1369, %s1388
                  %s1380 = sphi %s1371, %s1389
                $region80: #{tpu_custom_call.1} parent=69 // loop_header_branch
                  %1377 = sbr.rel (%p1374) target = $region84
                $region81: #{tpu_custom_call.1} parent=69 // loop_body
                  %v1381 = vld [vmem:[%s1379] sm:$0xff]
                  %1382 = vst [vmem:[%s1380] sm:$0xff] %v1381
                  %s1383 = sadd.s32 1, %s1378
                  %p1384 = scmp.ge.s32.totalorder %s1383, %s1366
                  %s1385 = scalar_select %p1384, 0, %s1383
                  %s1386 = smul.u32 %s1385, 8
                  %s1387 = smul.u32 %s1385, 8
                  %s1388 = scalar_lea.vmem %s1369, %s1386 [#allocation2]
                  %s1389 = scalar_lea.vmem %s1371, %s1387
                $region82: #{tpu_custom_call.1} parent=69 // loop_footer
                  %s1375 = sadd.s32 %s1373, 1
                $region83: #{tpu_custom_call.1} parent=69 // loop_footer_branch
                  %1372 = sbr.rel target = $region79
                $region84: #{tpu_custom_call.1} parent=69 // loop_exit
                  _
              $region70: #{tpu_custom_call.1} parent=47 // pred_fallthru
                _
              // Predicated region
              $region85: #{tpu_custom_call.1} parent=47 // pred_check
                _
              $region86: #{tpu_custom_call.1} parent=47 // pred_check_branch
                %1391 = sbr.rel target = $region88
              $region87: #{tpu_custom_call.1} parent=47 // pred_region
                _
              $region88: #{tpu_custom_call.1} parent=47 // pred_fallthru
                _
            $region48: #{tpu_custom_call.1} parent=43 // pred_fallthru
              _
            // Predicated region
            $region49: #{tpu_custom_call.1} parent=43 // pred_check
              _
            $region50: #{tpu_custom_call.1} parent=43 // pred_check_branch
              %1238 = sbr.rel target = $region52
            $region51: #{tpu_custom_call.1} parent=43 // pred_region
              %s1240 = sshrl.u32 %s1227, 4
              // While loop
              $region53: #{tpu_custom_call.1} parent=51 // loop_pre_header
                _
              $region54: #{tpu_custom_call.1} parent=51 // loop_header
                %s1242 = sphi 0, %s1244
                %p1243 = scmp.ge.s32.totalorder %s1242, %s1240
                %s1247 = sphi 0, %s1284
                %s1248 = sphi %s1220, %s1287
                %s1249 = sphi %s1231, %s1288
              $region55: #{tpu_custom_call.1} parent=51 // loop_header_branch
                %1246 = sbr.rel (%p1243) target = $region59
              $region56: #{tpu_custom_call.1} parent=51 // loop_body
                %v1250 = vld [vmem:[%s1248] sm:$0xff]
                %1251 = vst [vmem:[%s1249] sm:$0xff] %v1250
                %v1252 = vld [vmem:[%s1248 + $0x8] sm:$0xff]
                %1253 = vst [vmem:[%s1249 + $0x8] sm:$0xff] %v1252
                %v1254 = vld [vmem:[%s1248 + $0x10] sm:$0xff]
                %1255 = vst [vmem:[%s1249 + $0x10] sm:$0xff] %v1254
                %v1256 = vld [vmem:[%s1248 + $0x18] sm:$0xff]
                %1257 = vst [vmem:[%s1249 + $0x18] sm:$0xff] %v1256
                %v1258 = vld [vmem:[%s1248 + $0x20] sm:$0xff]
                %1259 = vst [vmem:[%s1249 + $0x20] sm:$0xff] %v1258
                %v1260 = vld [vmem:[%s1248 + $0x28] sm:$0xff]
                %1261 = vst [vmem:[%s1249 + $0x28] sm:$0xff] %v1260
                %v1262 = vld [vmem:[%s1248 + $0x30] sm:$0xff]
                %1263 = vst [vmem:[%s1249 + $0x30] sm:$0xff] %v1262
                %v1264 = vld [vmem:[%s1248 + $0x38] sm:$0xff]
                %1265 = vst [vmem:[%s1249 + $0x38] sm:$0xff] %v1264
                %v1266 = vld [vmem:[%s1248 + $0x40] sm:$0xff]
                %1267 = vst [vmem:[%s1249 + $0x40] sm:$0xff] %v1266
                %v1268 = vld [vmem:[%s1248 + $0x48] sm:$0xff]
                %1269 = vst [vmem:[%s1249 + $0x48] sm:$0xff] %v1268
                %v1270 = vld [vmem:[%s1248 + $0x50] sm:$0xff]
                %1271 = vst [vmem:[%s1249 + $0x50] sm:$0xff] %v1270
                %v1272 = vld [vmem:[%s1248 + $0x58] sm:$0xff]
                %1273 = vst [vmem:[%s1249 + $0x58] sm:$0xff] %v1272
                %v1274 = vld [vmem:[%s1248 + $0x60] sm:$0xff]
                %1275 = vst [vmem:[%s1249 + $0x60] sm:$0xff] %v1274
                %v1276 = vld [vmem:[%s1248 + $0x68] sm:$0xff]
                %1277 = vst [vmem:[%s1249 + $0x68] sm:$0xff] %v1276
                %v1278 = vld [vmem:[%s1248 + $0x70] sm:$0xff]
                %1279 = vst [vmem:[%s1249 + $0x70] sm:$0xff] %v1278
                %v1280 = vld [vmem:[%s1248 + $0x78] sm:$0xff]
                %1281 = vst [vmem:[%s1249 + $0x78] sm:$0xff] %v1280
                %s1282 = sadd.s32 1, %s1247
                %p1283 = scmp.ge.s32.totalorder %s1282, %s1240
                %s1284 = scalar_select %p1283, 0, %s1282
                %s1285 = smul.u32 %s1284, 128
                %s1286 = smul.u32 %s1284, 128
                %s1287 = scalar_lea.vmem %s1220, %s1285 [#allocation2]
                %s1288 = scalar_lea.vmem %s1231, %s1286
              $region57: #{tpu_custom_call.1} parent=51 // loop_footer
                %s1244 = sadd.s32 %s1242, 1
              $region58: #{tpu_custom_call.1} parent=51 // loop_footer_branch
                %1241 = sbr.rel target = $region54
              $region59: #{tpu_custom_call.1} parent=51 // loop_exit
                _
              %s1289 = sshrl.u32 %s1227, 4
              %s1290 = sand.u32 %s1227, 15
              %s1291 = smul.u32 %s1289, 16
              %s1292 = smul.u32 8, %s1291
              %s1293 = scalar_lea.vmem %s1220, %s1292 [#allocation2]
              %s1294 = smul.u32 8, %s1291
              %s1295 = scalar_lea.vmem %s1231, %s1294
              // While loop
              $region60: #{tpu_custom_call.1} parent=51 // loop_pre_header
                _
              $region61: #{tpu_custom_call.1} parent=51 // loop_header
                %s1297 = sphi 0, %s1299
                %p1298 = scmp.ge.s32.totalorder %s1297, %s1290
                %s1302 = sphi 0, %s1309
                %s1303 = sphi %s1293, %s1312
                %s1304 = sphi %s1295, %s1313
              $region62: #{tpu_custom_call.1} parent=51 // loop_header_branch
                %1301 = sbr.rel (%p1298) target = $region66
              $region63: #{tpu_custom_call.1} parent=51 // loop_body
                %v1305 = vld [vmem:[%s1303] sm:$0xff]
                %1306 = vst [vmem:[%s1304] sm:$0xff] %v1305
                %s1307 = sadd.s32 1, %s1302
                %p1308 = scmp.ge.s32.totalorder %s1307, %s1290
                %s1309 = scalar_select %p1308, 0, %s1307
                %s1310 = smul.u32 %s1309, 8
                %s1311 = smul.u32 %s1309, 8
                %s1312 = scalar_lea.vmem %s1293, %s1310 [#allocation2]
                %s1313 = scalar_lea.vmem %s1295, %s1311
              $region64: #{tpu_custom_call.1} parent=51 // loop_footer
                %s1299 = sadd.s32 %s1297, 1
              $region65: #{tpu_custom_call.1} parent=51 // loop_footer_branch
                %1296 = sbr.rel target = $region61
              $region66: #{tpu_custom_call.1} parent=51 // loop_exit
                _
            $region52: #{tpu_custom_call.1} parent=43 // pred_fallthru
              _
          $region44: #{tpu_custom_call.1} parent=39 // pred_fallthru
            _
          %1392 = vnop
        $region40: #{tpu_custom_call.1} parent=35 // pred_fallthru
          _
      $region36: #{tpu_custom_call.1} parent=5 // pred_fallthru
        _
      %p1393 = scmp.le.s32.totalorder 2, %s10
      // Predicated region
      $region89: #{tpu_custom_call.1} parent=5 // pred_check
        %p1394 = pneg %p1393
      $region90: #{tpu_custom_call.1} parent=5 // pred_check_branch
        %1396 = sbr.rel (%p1394) target = $region92
      $region91: #{tpu_custom_call.1} parent=5 // pred_region
        %s1397 = ssub.s32 %s10, 2
        // Predicated region
        $region93: #{tpu_custom_call.1} parent=91 // pred_check
          %p1398 = pneg %p133
        $region94: #{tpu_custom_call.1} parent=91 // pred_check_branch
          %1400 = sbr.rel (%p1398) target = $region96
        $region95: #{tpu_custom_call.1} parent=91 // pred_region
          %s1401 = sand.u32 %s118, 1
          %s1402 = sand.u32 %s118, 1
          %s1403 = smul.addr %s1402, 128
          %s1404 = scalar_lea.vmem [#allocation2], %s1403
        $region96: #{tpu_custom_call.1} parent=91 // pred_fallthru
          _
      $region92: #{tpu_custom_call.1} parent=5 // pred_fallthru
        _
    $region6: #{tpu_custom_call.1} parent=1 // loop_footer
      %s14 = sadd.s32 1, %s10
    $region7: #{tpu_custom_call.1} parent=1 // loop_footer_branch
      %9 = sbr.rel target = $region3
    $region8: #{tpu_custom_call.1} parent=1 // loop_exit
      _

</llo_original>
